<compile_context>
chip_gen: v6e
topology: v6e:2x2x1
jax: 0.10.0
libtpu: 0.0.40
codegen_flags: <defaults>
</compile_context>

<pallas_src>
import functools

import jax
import jax.numpy as jnp
from jax import lax
from jax.experimental import pallas as pl
from jax.experimental.pallas import tpu as pltpu


def _round_up(x, m):
    return ((x + m - 1) // m) * m


def _split_bias_linear_kernel(x_ref, w_ref, b_ref, o_ref, acc_ref):
    # x_ref:   (tn, tk)  activations
    # w_ref:   (tm, tk)  nn.Linear weight in its native (out, in) layout
    # b_ref:   (1,  tm)  bias (f32)
    # o_ref:   (tn, tm)  output tile
    # acc_ref: (tn, tm)  f32 accumulator, persists across the K grid axis
    k = pl.program_id(2)

    @pl.when(k == 0)
    def _():
        acc_ref[...] = jnp.zeros_like(acc_ref)

    # Contract the K axis of both operands directly (no pre-transposed weight):
    # (tn, tk) . (tm, tk)^T -> (tn, tm), accumulated in f32 on the MXU.
    acc_ref[...] += lax.dot_general(
        x_ref[...], w_ref[...],
        dimension_numbers=(((1,), (1,)), ((), ())),
        preferred_element_type=jnp.float32)

    # AddBias epilogue: only once, on the last K step (keeps the VPU out of the
    # reduction loop; bias is already f32, no cast needed).
    @pl.when(k == pl.num_programs(2) - 1)
    def _():
        o_ref[...] = (acc_ref[...] + b_ref[...]).astype(o_ref.dtype)


@functools.partial(jax.jit, static_argnames=("compute_dtype",))
def split_bias_linear(x, weight, bias, compute_dtype=None):
    """Pallas implementation of SplitBias(nn.Linear(K, M)).forward(x).

    x:      (N, K)  float32
    weight: (M, K)  float32   (native PyTorch nn.Linear layout — NOT transposed)
    bias:   (M,)    float32
    compute_dtype: optional dtype (e.g. jnp.bfloat16) for the matmul operands
                   on v6e/v7x; accumulation is always f32.
    returns (N, M)  x.dtype
    """
    n, k = x.shape
    m, k2 = weight.shape
    assert k == k2, "weight must be (out_features, in_features)"

    # Tile sizes sized for the 256x256 MXU (v6e/v7x) and well under the 32 MiB
    # scoped-VMEM default on v7x (double-buffered inputs + acc << 4 MiB).
    TN, TM, TK = 128, 256, 512

    n_pad = _round_up(n, 8)
    tn = min(TN, n_pad)
    n_pad = _round_up(n, tn)

    m_pad = _round_up(m, 128)          # lane-dense output (>= 128 wide stores)
    tm = min(TM, m_pad)
    m_pad = _round_up(m, tm)

    k_pad = _round_up(k, 128)
    tk = min(TK, k_pad)
    k_pad = _round_up(k, tk)

    # Zero padding is exact: padded K columns contribute 0 to the dot, padded
    # N rows / M columns are sliced off below.
    x_p = x if (n_pad == n and k_pad == k) else jnp.pad(
        x, ((0, n_pad - n), (0, k_pad - k)))
    w_p = weight if (m_pad == m and k_pad == k) else jnp.pad(
        weight, ((0, m_pad - m), (0, k_pad - k)))
    b_2d = bias.reshape(1, -1).astype(jnp.float32)
    b_p = b_2d if m_pad == m else jnp.pad(b_2d, ((0, 0), (0, m_pad - m)))

    if compute_dtype is not None:
        x_p = x_p.astype(compute_dtype)
        w_p = w_p.astype(compute_dtype)

    out_p = pl.pallas_call(
        _split_bias_linear_kernel,
        out_shape=jax.ShapeDtypeStruct((n_pad, m_pad), x.dtype),
        grid_spec=pltpu.PrefetchScalarGridSpec(
            num_scalar_prefetch=0,
            grid=(n_pad // tn, m_pad // tm, k_pad // tk),
            in_specs=[
                pl.BlockSpec((tn, tk), lambda i, j, kk: (i, kk)),   # x
                pl.BlockSpec((tm, tk), lambda i, j, kk: (j, kk)),   # weight (M,K)
                pl.BlockSpec((1, tm), lambda i, j, kk: (0, j)),     # bias
            ],
            out_specs=pl.BlockSpec((tn, tm), lambda i, j, kk: (i, j)),
            scratch_shapes=[pltpu.VMEM((tn, tm), jnp.float32)],
        ),
        compiler_params=pltpu.CompilerParams(
            dimension_semantics=("parallel", "parallel", "arbitrary")),
    )(x_p, w_p, b_p)

    return out_p[:n, :m]


if __name__ == "__main__":
    key = jax.random.PRNGKey(0)
    k_x, k_w, k_b, k_x2, k_w2, k_b2 = jax.random.split(key, 6)

    # --- ACKTR-head toy size: single grid step, lane-dense padded output. ---
    n, in_f, out_f = 8, 32, 16
    x = jax.random.normal(k_x, (n, in_f), dtype=jnp.float32)
    w = jax.random.normal(k_w, (out_f, in_f), dtype=jnp.float32) * 0.1
    b = jax.random.normal(k_b, (out_f,), dtype=jnp.float32)

    out = jax.block_until_ready(split_bias_linear(x, w, b))
    ref = x @ w.T + b.reshape(1, -1)           # SplitBias(nn.Linear) reference
    assert out.shape == (n, out_f)
    assert jnp.allclose(out, ref, atol=1e-4, rtol=1e-4), "small-shape mismatch"

    # --- Multi-tile shape: exercises the (N, M, K) grid + f32 accumulator. ---
    n2, in_f2, out_f2 = 160, 640, 384
    x2 = jax.random.normal(k_x2, (n2, in_f2), dtype=jnp.float32)
    w2 = jax.random.normal(k_w2, (out_f2, in_f2), dtype=jnp.float32) * 0.05
    b2 = jax.random.normal(k_b2, (out_f2,), dtype=jnp.float32)

    out2 = jax.block_until_ready(split_bias_linear(x2, w2, b2))
    ref2 = x2 @ w2.T + b2.reshape(1, -1)
    assert out2.shape == (n2, out_f2)
    assert jnp.allclose(out2, ref2, atol=1e-2, rtol=1e-2), "tiled-shape mismatch"

    # TODO(synk): Conv2d inner-module variant (4-D AddBias branch,
    # bias.view(1, -1, 1, 1)) would need an im2col/conv kernel; the ACKTR head
    # usage (Linear) is covered here.

    print("KERNEL_OK")
</pallas_src>

<mosaic_0001>
module attributes {stable_mosaic.version = 11 : i64} {
  func.func @_split_bias_linear_kernel(%arg0: i32, %arg1: i32, %arg2: i32, %arg3: memref<8x128xf32, #tpu.memory_space<vmem>>, %arg4: memref<128x128xf32, #tpu.memory_space<vmem>>, %arg5: memref<1x128xf32, #tpu.memory_space<vmem>>, %arg6: memref<8x128xf32, #tpu.memory_space<vmem>>, %arg7: memref<8x128xf32, #tpu.memory_space<vmem>>) attributes {dimension_semantics = [#tpu.dimension_semantics<parallel>, #tpu.dimension_semantics<parallel>, #tpu.dimension_semantics<arbitrary>], iteration_bounds = array<i64: 1, 1, 1>, scalar_prefetch = 0 : i64, scratch_operands = 1 : i64, tpu.core_type = #tpu.core_type<tc>, window_params = [{transform_indices = @transform_0, window_bounds = array<i64: 8, 128>}, {transform_indices = @transform_1, window_bounds = array<i64: 128, 128>}, {transform_indices = @transform_2, window_bounds = array<i64: 1, 128>}, {transform_indices = @transform_3, window_bounds = array<i64: 8, 128>}]} {
    %c0_i32 = arith.constant 0 : i32
    %0 = arith.cmpi eq, %arg2, %c0_i32 : i32
    %1 = arith.extui %0 : i1 to i32
    %c0_i32_0 = arith.constant 0 : i32
    %2 = arith.cmpi ne, %1, %c0_i32_0 : i32
    scf.if %2 {
      %cst_10 = arith.constant 0.000000e+00 : f32
      %12 = vector.broadcast %cst_10 : f32 to vector<8x128xf32>
      %c0_11 = arith.constant 0 : index
      %c0_12 = arith.constant 0 : index
      %13 = vector.load %arg7[%c0_11, %c0_12] : memref<8x128xf32, #tpu.memory_space<vmem>>, vector<8x128xf32>
      tpu.vector_store %arg7[%c0_11, %c0_12], %12 {strides = array<i32>} : memref<8x128xf32, #tpu.memory_space<vmem>>, vector<8x128xf32>,
    } else {
    }
    %c0 = arith.constant 0 : index
    %c0_1 = arith.constant 0 : index
    %3 = vector.load %arg7[%c0, %c0_1] : memref<8x128xf32, #tpu.memory_space<vmem>>, vector<8x128xf32>
    %c0_2 = arith.constant 0 : index
    %c0_3 = arith.constant 0 : index
    %4 = vector.load %arg3[%c0_2, %c0_3] : memref<8x128xf32, #tpu.memory_space<vmem>>, vector<8x128xf32>
    %c0_4 = arith.constant 0 : index
    %c0_5 = arith.constant 0 : index
    %5 = vector.load %arg4[%c0_4, %c0_5] : memref<128x128xf32, #tpu.memory_space<vmem>>, vector<128x128xf32>
    %cst = arith.constant dense<0.000000e+00> : vector<8x128xf32>
    %6 = tpu.matmul %4, %5, %cst {dimension_numbers = #tpu.dot_dimension_numbers<[1], [1], [0], [0], [0, 0, 1, 0], [], []>} : vector<8x128xf32>, vector<128x128xf32>, vector<8x128xf32> -> vector<8x128xf32>
    %7 = arith.addf %3, %6 : vector<8x128xf32>
    %c0_6 = arith.constant 0 : index
    %c0_7 = arith.constant 0 : index
    %8 = vector.load %arg7[%c0_6, %c0_7] : memref<8x128xf32, #tpu.memory_space<vmem>>, vector<8x128xf32>
    tpu.vector_store %arg7[%c0_6, %c0_7], %7 {strides = array<i32>} : memref<8x128xf32, #tpu.memory_space<vmem>>, vector<8x128xf32>,
    %c0_i32_8 = arith.constant 0 : i32
    %9 = arith.cmpi eq, %arg2, %c0_i32_8 : i32
    %10 = arith.extui %9 : i1 to i32
    %c0_i32_9 = arith.constant 0 : i32
    %11 = arith.cmpi ne, %10, %c0_i32_9 : i32
    scf.if %11 {
      %c0_10 = arith.constant 0 : index
      %c0_11 = arith.constant 0 : index
      %12 = vector.load %arg7[%c0_10, %c0_11] : memref<8x128xf32, #tpu.memory_space<vmem>>, vector<8x128xf32>
      %c0_12 = arith.constant 0 : index
      %c0_13 = arith.constant 0 : index
      %13 = vector.load %arg5[%c0_12, %c0_13] : memref<1x128xf32, #tpu.memory_space<vmem>>, vector<1x128xf32>
      %14 = vector.broadcast %13 : vector<1x128xf32> to vector<8x128xf32>
      %15 = arith.addf %12, %14 : vector<8x128xf32>
      %c0_14 = arith.constant 0 : index
      %c0_15 = arith.constant 0 : index
      %16 = vector.load %arg6[%c0_14, %c0_15] : memref<8x128xf32, #tpu.memory_space<vmem>>, vector<8x128xf32>
      tpu.vector_store %arg6[%c0_14, %c0_15], %15 {strides = array<i32>} : memref<8x128xf32, #tpu.memory_space<vmem>>, vector<8x128xf32>,
    } else {
    }
    return
  }
  func.func @transform_0(%arg0: i32, %arg1: i32, %arg2: i32) -> (i32, i32) {
    %c0_i32 = arith.constant 0 : i32
    return %arg0, %arg2 : i32, i32
  }
  func.func @transform_1(%arg0: i32, %arg1: i32, %arg2: i32) -> (i32, i32) {
    %c0_i32 = arith.constant 0 : i32
    return %arg1, %arg2 : i32, i32
  }
  func.func @transform_2(%arg0: i32, %arg1: i32, %arg2: i32) -> (i32, i32) {
    %c0_i32 = arith.constant 0 : i32
    %c0_i32_0 = arith.constant 0 : i32
    return %c0_i32, %arg1 : i32, i32
  }
  func.func @transform_3(%arg0: i32, %arg1: i32, %arg2: i32) -> (i32, i32) {
    %c0_i32 = arith.constant 0 : i32
    return %arg0, %arg1 : i32, i32
  }
}

</mosaic_0001>

<llo_original>
// kernel: split_bias_linear.1
$region0: #{split_bias_linear.1}
  #allocation0 [shape = 'u32[]', space=smem, size = 0x4, offset = 0x4, fixed_abs, tag = 'smem constant byte address 0x4 - core index']
  #allocation1 [shape = 'u32[144,128]{1,0:T(1,128)}', space=vmem, size = 0x12000, scoped, tag = 'internal scratch']
  #allocation2 [shape = 'f32[8,128]{1,0:T(8,128)}', space=vmem, size = 0x1000, scoped, tag = 'scratch operand']
  %s0 = inlined_call_operand.vmem [shape: f32[8,128], index: 0, kind: input, shape index: {}]
  %s1 = inlined_call_operand.vmem [shape: f32[128,128], index: 1, kind: input, shape index: {}]
  %s2 = inlined_call_operand.vmem [shape: f32[1,128], index: 2, kind: input, shape index: {}]
  %s3 = inlined_call_operand.hbm [shape: f32[8,128], index: 3, kind: output, shape index: {}]
  %s4 = sld [smem:[#allocation0]]
  $region30: #{split_bias_linear.1} parent=0
    _
  %s6 = ssub.s32 1, %s4
  %s7 = scalar_select 0, %s6, %s4
  $region1: #{split_bias_linear.1} parent=0
    #allocation3 [shape = 'u8[4096]{0}', space=vmem, size = 0x1000, scoped, tag = 'output window, operand 0, single buffered']
    #allocation4 [shape = 's32[1]{0}', space=sflag, size = 0x4, scoped, tag = 'scoped memory for split_bias_linear.1']
    %8 = vsyncpa [#allocation4], 0
    // Predicated region
    $region2: #{split_bias_linear.1} parent=1 // pred_check
      _
    $region3: #{split_bias_linear.1} parent=1 // pred_check_branch
      %10 = sbr.rel (0) target = $region5
    $region4: #{split_bias_linear.1} parent=1 // pred_region
      _
    $region5: #{split_bias_linear.1} parent=1 // pred_fallthru
      _
    // Predicated region
    $region6: #{split_bias_linear.1} parent=1 // pred_check
      _
    $region7: #{split_bias_linear.1} parent=1 // pred_check_branch
      %12 = sbr.rel (0) target = $region9
    $region8: #{split_bias_linear.1} parent=1 // pred_region
      _
    $region9: #{split_bias_linear.1} parent=1 // pred_fallthru
      _
    // Predicated region
    $region10: #{split_bias_linear.1} parent=1 // pred_check
      _
    $region11: #{split_bias_linear.1} parent=1 // pred_check_branch
      %14 = sbr.rel (0) target = $region13
    $region12: #{split_bias_linear.1} parent=1 // pred_region
      _
    $region13: #{split_bias_linear.1} parent=1 // pred_fallthru
      _
    %p15 = scmp.eq.s32.totalorder 0, 0
    // Predicated region
    $region14: #{split_bias_linear.1} parent=1 // pred_check
      %p16 = pneg %p15
    $region15: #{split_bias_linear.1} parent=1 // pred_check_branch
      %18 = sbr.rel (%p16) target = $region17
    $region16: #{split_bias_linear.1} parent=1 // pred_region
      %19 = vst [vmem:[#allocation2] sm:$0xff] 0.0
    $region17: #{split_bias_linear.1} parent=1 // pred_fallthru
      _
    %v20 = vld [vmem:[#allocation2] sm:$0xff]
    %v21 = vld [vmem:[%s0] sm:$0xff]
    %v22 = vld [vmem:[%s1] sm:$0xff]
    %v23 = vld [vmem:[%s1 + $0x8] sm:$0xff]
    %v24 = vld [vmem:[%s1 + $0x10] sm:$0xff]
    %v25 = vld [vmem:[%s1 + $0x18] sm:$0xff]
    %v26 = vld [vmem:[%s1 + $0x20] sm:$0xff]
    %v27 = vld [vmem:[%s1 + $0x28] sm:$0xff]
    %v28 = vld [vmem:[%s1 + $0x30] sm:$0xff]
    %v29 = vld [vmem:[%s1 + $0x38] sm:$0xff]
    %v30 = vld [vmem:[%s1 + $0x40] sm:$0xff]
    %v31 = vld [vmem:[%s1 + $0x48] sm:$0xff]
    %v32 = vld [vmem:[%s1 + $0x50] sm:$0xff]
    %v33 = vld [vmem:[%s1 + $0x58] sm:$0xff]
    %v34 = vld [vmem:[%s1 + $0x60] sm:$0xff]
    %v35 = vld [vmem:[%s1 + $0x68] sm:$0xff]
    %v36 = vld [vmem:[%s1 + $0x70] sm:$0xff]
    %v37 = vld [vmem:[%s1 + $0x78] sm:$0xff]
    %38 = vmatprep.subr.mxu0 0.0
    %39 = vmatpush1.xpose.msra.mxu0 %v37
    %40 = vmatprep.subr.mxu0 0.0
    %41 = vmatpush1.xpose.msra.mxu0 %v36
    %42 = vmatprep.subr.mxu0 0.0
    %43 = vmatpush1.xpose.msra.mxu0 %v35
    %44 = vmatprep.subr.mxu0 0.0
    %45 = vmatpush1.xpose.msra.mxu0 %v34
    %46 = vmatprep.subr.mxu0 0.0
    %47 = vmatpush1.xpose.msra.mxu0 %v33
    %48 = vmatprep.subr.mxu0 0.0
    %49 = vmatpush1.xpose.msra.mxu0 %v32
    %50 = vmatprep.subr.mxu0 0.0
    %51 = vmatpush1.xpose.msra.mxu0 %v31
    %52 = vmatprep.subr.mxu0 0.0
    %53 = vmatpush1.xpose.msra.mxu0 %v30
    %54 = vmatprep.subr.mxu0 0.0
    %55 = vmatpush1.xpose.msra.mxu0 %v29
    %56 = vmatprep.subr.mxu0 0.0
    %57 = vmatpush1.xpose.msra.mxu0 %v28
    %58 = vmatprep.subr.mxu0 0.0
    %59 = vmatpush1.xpose.msra.mxu0 %v27
    %60 = vmatprep.subr.mxu0 0.0
    %61 = vmatpush1.xpose.msra.mxu0 %v26
    %62 = vmatprep.subr.mxu0 0.0
    %63 = vmatpush1.xpose.msra.mxu0 %v25
    %64 = vmatprep.subr.mxu0 0.0
    %65 = vmatpush1.xpose.msra.mxu0 %v24
    %66 = vmatprep.subr.mxu0 0.0
    %67 = vmatpush1.xpose.msra.mxu0 %v23
    %68 = vmatprep.subr.mxu0 0.0
    %69 = vmatpush1.xpose.msra.mxu0 %v22
    %70 = vmatprep.subr.mxu0 0.0
    %71 = vmatpush2.xpose.msra.mxu0 0.0
    %72 = vmatprep.subr.mxu0 0.0
    %73 = vmatpush2.xpose.msra.mxu0 0.0
    %74 = vmatprep.subr.mxu0 0.0
    %75 = vmatpush2.xpose.msra.mxu0 0.0
    %76 = vmatprep.subr.mxu0 0.0
    %77 = vmatpush2.xpose.msra.mxu0 0.0
    %78 = vmatprep.subr.mxu0 0.0
    %79 = vmatpush2.xpose.msra.mxu0 0.0
    %80 = vmatprep.subr.mxu0 0.0
    %81 = vmatpush2.xpose.msra.mxu0 0.0
    %82 = vmatprep.subr.mxu0 0.0
    %83 = vmatpush2.xpose.msra.mxu0 0.0
    %84 = vmatprep.subr.mxu0 0.0
    %85 = vmatpush2.xpose.msra.mxu0 0.0
    %86 = vmatprep.subr.mxu0 0.0
    %87 = vmatpush2.xpose.msra.mxu0 0.0
    %88 = vmatprep.subr.mxu0 0.0
    %89 = vmatpush2.xpose.msra.mxu0 0.0
    %90 = vmatprep.subr.mxu0 0.0
    %91 = vmatpush2.xpose.msra.mxu0 0.0
    %92 = vmatprep.subr.mxu0 0.0
    %93 = vmatpush2.xpose.msra.mxu0 0.0
    %94 = vmatprep.subr.mxu0 0.0
    %95 = vmatpush2.xpose.msra.mxu0 0.0
    %96 = vmatprep.subr.mxu0 0.0
    %97 = vmatpush2.xpose.msra.mxu0 0.0
    %98 = vmatprep.subr.mxu0 0.0
    %99 = vmatpush2.xpose.msra.mxu0 0.0
    %100 = vmatprep.subr.mxu0 0.0
    %101 = vmatpush2.xpose.msra.mxu0 0.0
    %102 = vmatprep.mubr.f32.mxu0 0.0
    %103 = vmatmul.mubr.f32.gmra.mxu0 %v21
    %v104 = vpop.f32.mrf.mxu0
    %v105 = vadd.f32 0.0, %v104
    %v106 = vpop.f32.mrf.mxu0
    %107 = vdwg.mxu0
    %v108 = vadd.f32 %v20, %v105
    %109 = vst [vmem:[#allocation2] sm:$0xff] %v108
    // Predicated region
    $region18: #{split_bias_linear.1} parent=1 // pred_check
      %p110 = pneg %p15
    $region19: #{split_bias_linear.1} parent=1 // pred_check_branch
      %112 = sbr.rel (%p110) target = $region21
    $region20: #{split_bias_linear.1} parent=1 // pred_region
      %v113 = vld [vmem:[#allocation2] sm:$0xff]
      %v114 = vld [vmem:[%s2] sm:$0x1]
      %v116 = vlaneseq
      %v117 = vshrl.u32 %v116, 7
      %v118 = vsub.s32 0, %v117
      %v119 = vrot.slane %v114, %v118
      %v121 = vadd.f32 %v113, %v119
      %122 = vst [vmem:[#allocation3] sm:$0xff] %v121
    $region21: #{split_bias_linear.1} parent=1 // pred_fallthru
      _
    // Predicated region
    $region22: #{split_bias_linear.1} parent=1 // pred_check
      _
    $region23: #{split_bias_linear.1} parent=1 // pred_check_branch
      %124 = sbr.rel (0) target = $region25
    $region24: #{split_bias_linear.1} parent=1 // pred_region
      %s126 = ssub.s32 128, 128
      %127 = vsyncadd [#allocation4], %s126
      %s129 = sshll.u32 [#allocation3], 4
      %s130 = int_to_ptr.vmem [resolvable:$true] %s129
      %132 = dma.vmem_to_hbm [thread:$0]  %s130, 128, %s3, [#allocation4]
    $region25: #{split_bias_linear.1} parent=1 // pred_fallthru
      _
    // Predicated region
    $region26: #{split_bias_linear.1} parent=1 // pred_check
      _
    $region27: #{split_bias_linear.1} parent=1 // pred_check_branch
      %134 = sbr.rel (0) target = $region29
    $region28: #{split_bias_linear.1} parent=1 // pred_region
      %135 = dma.done [#allocation4], 128
    $region29: #{split_bias_linear.1} parent=1 // pred_fallthru
      _
    %136 = vsyncpa [#allocation4], 1

</llo_original>
